<compile_context>
chip_gen: v7x
topology: tpu7x:2x2x1
jax: 0.10.0
libtpu: 0.0.40
codegen_flags: <defaults>
</compile_context>

<pallas_src>
import jax
import jax.numpy as jnp
import numpy as np
from jax.experimental import pallas as pl
from jax.experimental.pallas import tpu as pltpu

_LANE = 128  # TPU lane width — last block dim, kept full & 128-wide.

# Minimum sublane multiple per element size (f32 -> 8, bf16 -> 16, int8/fp8 -> 32).
_SUBLANE_BY_ITEMSIZE = {4: 8, 2: 16, 1: 32}


def _function_node_kernel(x_ref, o_ref):
    # Elementwise hot path of the (identity) forward pass.
    # TODO(synk): concrete FunctionNode subclasses replace this body with
    # their real elementwise math; the tiling / pipelining stays the same.
    o_ref[...] = x_ref[...]


def _round_up(n: int, m: int) -> int:
    return ((n + m - 1) // m) * m


def _cdiv(a: int, b: int) -> int:
    return -(-a // b)


def _pick_tile_rows(rows: int, itemsize: int) -> int:
    """Rows per block: dtype-aware sublane rounding, generation-aware size."""
    sublane = _SUBLANE_BY_ITEMSIZE.get(itemsize, 8)
    if rows <= sublane:
        # Single block equal to the full array extent (always a legal block).
        return rows
    # ~1 MiB blocks hit ~86% of HBM roofline on v5e/v6e; v7x's 3.2 TB/s HBM
    # under-amortizes the ~0.35 us per-step overhead, so go to ~2 MiB there.
    target_bytes = 1 << 20
    try:
        if "v7" in jax.devices()[0].device_kind.lower():
            target_bytes = 2 << 20
    except Exception:
        pass
    tile_rows = max(sublane, target_bytes // (_LANE * itemsize))
    # Guarantee >=2 grid steps on medium inputs so both v7x TensorCores get a
    # block (harmless on single-TC v5e/v6e).
    half = max(sublane, _round_up(_cdiv(rows, 2), sublane))
    tile_rows = min(tile_rows, half)
    return _round_up(tile_rows, sublane)


def _forward_impl(x: jnp.ndarray) -> jnp.ndarray:
    """FunctionNode.forward (identity pass-through) as a streaming Pallas copy."""
    orig_shape = x.shape
    n = x.size
    itemsize = jnp.dtype(x.dtype).itemsize

    if n % _LANE == 0:
        # Contiguous, zero-copy lane-dense reshape — no padding pass.
        x2d = x.reshape((n // _LANE, _LANE))
        padded = False
    else:
        # Fallback: pad only up to the next multiple of 128 lanes.
        n_pad = _round_up(n, _LANE)
        flat = jnp.pad(x.reshape((n,)), (0, n_pad - n))
        x2d = flat.reshape((n_pad // _LANE, _LANE))
        padded = True

    rows = x2d.shape[0]
    tile_rows = _pick_tile_rows(rows, itemsize)
    grid = (_cdiv(rows, tile_rows),)  # ragged final block is masked by Pallas

    y2d = pl.pallas_call(
        _function_node_kernel,
        out_shape=jax.ShapeDtypeStruct(x2d.shape, x.dtype),
        grid=grid,
        in_specs=[pl.BlockSpec((tile_rows, _LANE), lambda i: (i, 0))],
        out_specs=pl.BlockSpec((tile_rows, _LANE), lambda i: (i, 0)),
        compiler_params=pltpu.CompilerParams(
            dimension_semantics=("parallel",),  # shard grid across TCs (v7x)
        ),
    )(x2d)

    if padded:
        return y2d.reshape((-1,))[:n].reshape(orig_shape)
    return y2d.reshape(orig_shape)


# jit fuses reshape / pad / pallas_call / slice into one program (no eager
# per-op HBM round trips); all tiling logic above is static-shape trace-time.
function_node_forward = jax.jit(_forward_impl)


class FunctionNodePallas:
    """JAX/Pallas mirror of the PyTorch FunctionNode base class."""

    def __init__(self, input_dim: int):
        self.input_dim = input_dim
        self.output_dim = None  # base class leaves this unset
        # No parameters: the PyTorch base class defines none.

    def forward(self, x: jnp.ndarray) -> jnp.ndarray:
        return function_node_forward(x)

    def describe(self) -> str:
        return f"{self.__class__.__name__} with params: {{}}"

    def set_trainable(self, trainable: bool):
        # No parameters in the base class; nothing to toggle.
        pass


if __name__ == "__main__":
    key = jax.random.PRNGKey(0)
    batch, input_dim = 8, 32
    x = jax.random.normal(key, (batch, input_dim), dtype=jnp.float32)
    x_expected = np.asarray(x)  # independent host copy

    node = FunctionNodePallas(input_dim=input_dim)
    y = node.forward(x)
    y = jax.block_until_ready(y)

    assert y.shape == x_expected.shape and y.dtype == x.dtype
    assert bool(jnp.allclose(np.asarray(y), x_expected))
    print("KERNEL_OK")
</pallas_src>

<mosaic_0001>
module attributes {stable_mosaic.version = 11 : i64} {
  func.func @_function_node_kernel(%arg0: i32, %arg1: memref<2x128xf32, #tpu.memory_space<vmem>>, %arg2: memref<2x128xf32, #tpu.memory_space<vmem>>) attributes {dimension_semantics = [#tpu.dimension_semantics<parallel>], iteration_bounds = array<i64: 1>, scalar_prefetch = 0 : i64, scratch_operands = 0 : i64, tpu.core_type = #tpu.core_type<tc>, window_params = [{transform_indices = @transform_0, window_bounds = array<i64: 2, 128>}, {transform_indices = @transform_1, window_bounds = array<i64: 2, 128>}]} {
    %c0 = arith.constant 0 : index
    %c0_0 = arith.constant 0 : index
    %0 = vector.load %arg1[%c0, %c0_0] : memref<2x128xf32, #tpu.memory_space<vmem>>, vector<2x128xf32>
    %c0_1 = arith.constant 0 : index
    %c0_2 = arith.constant 0 : index
    %1 = vector.load %arg2[%c0_1, %c0_2] : memref<2x128xf32, #tpu.memory_space<vmem>>, vector<2x128xf32>
    tpu.vector_store %arg2[%c0_1, %c0_2], %0 {strides = array<i32>} : memref<2x128xf32, #tpu.memory_space<vmem>>, vector<2x128xf32>,
    return
  }
  func.func @transform_0(%arg0: i32) -> (i32, i32) {
    %c0_i32 = arith.constant 0 : i32
    %c0_i32_0 = arith.constant 0 : i32
    return %arg0, %c0_i32 : i32, i32
  }
  func.func @transform_1(%arg0: i32) -> (i32, i32) {
    %c0_i32 = arith.constant 0 : i32
    %c0_i32_0 = arith.constant 0 : i32
    return %arg0, %c0_i32 : i32, i32
  }
}

</mosaic_0001>

<llo_original>
// kernel: _forward_impl.1
$region0: #{_forward_impl.1}
  #allocation0 [shape = 'u32[]', space=smem, size = 0x4, offset = 0x4, fixed_abs, tag = 'smem constant byte address 0x4 - core index']
  #allocation1 [shape = 'u32[144,128]{1,0:T(1,128)}', space=vmem, size = 0x12000, scoped, tag = 'internal scratch']
  %s0 = inlined_call_operand.vmem [shape: f32[2,128], index: 0, kind: input, shape index: {}]
  %s1 = inlined_call_operand.vmem [shape: f32[2,128], index: 1, kind: output, shape index: {}]
  %s2 = sld [smem:[#allocation0]]
  $region14: #{_forward_impl.1} parent=0
    _
  %s4 = ssub.s32 1, %s2
  %s5 = scalar_select 0, %s4, %s2
  // Predicated region
  $region2: #{_forward_impl.1} parent=0 // pred_check
    _
  $region3: #{_forward_impl.1} parent=0 // pred_check_branch
    %7 = sbr.rel (0) target = $region5
  $region4: #{_forward_impl.1} parent=0 // pred_region
    _
  $region5: #{_forward_impl.1} parent=0 // pred_fallthru
    _
  %v8 = vld [vmem:[%s0] sm:$0x3]
  %9 = vst [vmem:[%s1] sm:$0x3] %v8
  // Predicated region
  $region6: #{_forward_impl.1} parent=0 // pred_check
    _
  $region7: #{_forward_impl.1} parent=0 // pred_check_branch
    %11 = sbr.rel (0) target = $region9
  $region8: #{_forward_impl.1} parent=0 // pred_region
    _
  $region9: #{_forward_impl.1} parent=0 // pred_fallthru
    _
  // Predicated region
  $region10: #{_forward_impl.1} parent=0 // pred_check
    _
  $region11: #{_forward_impl.1} parent=0 // pred_check_branch
    %13 = sbr.rel (0) target = $region13
  $region12: #{_forward_impl.1} parent=0 // pred_region
    _
  $region13: #{_forward_impl.1} parent=0 // pred_fallthru
    _

</llo_original>
